<compile_context>
chip_gen: v7x
topology: tpu7x:2x2x1
jax: 0.10.0
libtpu: 0.0.40
codegen_flags: <defaults>
</compile_context>

<pallas_src>
import math

import jax
import jax.numpy as jnp
from jax.experimental import pallas as pl
from jax.experimental.pallas import tpu as pltpu

_SHIFT = math.log(2.0)        # == torch.log(torch.tensor(2.0)).item()
_THRESHOLD = 20.0             # PyTorch F.softplus default threshold (beta=1)


def _shifted_softplus_kernel(x_ref, o_ref):
    x = x_ref[...].astype(jnp.float32)
    # PyTorch softplus semantics (beta=1, threshold=20): linear above the
    # threshold, log1p(exp(x)) below (clamped so exp never overflows).
    sp = jnp.where(x > _THRESHOLD, x, jnp.log1p(jnp.exp(jnp.minimum(x, _THRESHOLD))))
    o_ref[...] = (sp - _SHIFT).astype(o_ref.dtype)


def _shifted_softplus_ref(x):
    """Plain-JAX reference / tiny-input fast path (XLA fuses it in place)."""
    xf = x.astype(jnp.float32)
    sp = jnp.where(xf > _THRESHOLD, xf, jnp.log1p(jnp.exp(jnp.minimum(xf, _THRESHOLD))))
    return (sp - _SHIFT).astype(x.dtype)


def _round_up(v, m):
    return ((v + m - 1) // m) * m


def shifted_softplus(x, *, target_block_bytes=2 << 20, min_pallas_elems=1 << 15):
    """Applies ShiftedSoftplus elementwise to an array of any shape."""
    orig_shape = x.shape
    dtype = x.dtype
    n = int(x.size)

    # Tiny / 0-d / 1-d activations (e.g. SchNet (num_nodes, hidden) with few
    # nodes): a standalone kernel is pure launch overhead — let XLA fuse it.
    if n == 0 or n < min_pallas_elems or x.ndim < 2:
        return _shifted_softplus_ref(x)

    # Collapse leading dims only; the lane (last) dim is untouched so this
    # reshape is layout-free (no relayout copy).
    C = orig_shape[-1]
    R = n // C
    x2d = x.reshape(R, C)

    itemsize = jnp.dtype(dtype).itemsize
    sub = max(8, 32 // itemsize)                 # dtype-safe sublane multiple
    target_elems = max(sub * 128, target_block_bytes // itemsize)

    if C * sub <= target_elems:
        # Common case: whole rows fit in one block width.  1-D grid over rows,
        # lane width = native last dim (lane-dense, no padding); the partial
        # last row-block (if any) is masked by Pallas.
        block_cols = C
        block_rows = min(R, max(sub, (target_elems // C) // sub * sub))
        # Keep >= 2 blocks when possible so the 'parallel' grid feeds both
        # TensorCores on v7x.
        if pl.cdiv(R, block_rows) < 2 and R > sub:
            block_rows = max(sub, _round_up(pl.cdiv(R, 2), sub))
        grid = (pl.cdiv(R, block_rows),)
        in_specs = [pl.BlockSpec((block_rows, block_cols), lambda i: (i, 0))]
        out_specs = pl.BlockSpec((block_rows, block_cols), lambda i: (i, 0))
        semantics = ("parallel",)
    else:
        # Very wide rows: tile the lane dim too with 128-multiple blocks.
        block_rows = sub
        block_cols = min(_round_up(C, 128),
                         max(128, ((target_elems // sub) // 128) * 128))
        grid = (pl.cdiv(R, block_rows), pl.cdiv(C, block_cols))
        in_specs = [pl.BlockSpec((block_rows, block_cols), lambda i, j: (i, j))]
        out_specs = pl.BlockSpec((block_rows, block_cols), lambda i, j: (i, j))
        semantics = ("parallel", "parallel")

    block_bytes = block_rows * block_cols * itemsize
    # double-buffered input + output, plus margin; capped at v7x physical VMEM.
    vmem_limit = min(64 << 20, max(16 << 20, 6 * block_bytes))

    out2d = pl.pallas_call(
        _shifted_softplus_kernel,
        out_shape=jax.ShapeDtypeStruct((R, C), dtype),
        grid_spec=pltpu.PrefetchScalarGridSpec(
            num_scalar_prefetch=0,
            grid=grid,
            in_specs=in_specs,
            out_specs=out_specs,
        ),
        compiler_params=pltpu.CompilerParams(
            dimension_semantics=semantics,
            vmem_limit_bytes=vmem_limit,
        ),
        cost_estimate=pl.CostEstimate(
            flops=4 * n,
            transcendentals=2 * n,
            bytes_accessed=2 * n * itemsize,
        ),
    )(x2d)

    return out2d.reshape(orig_shape)


if __name__ == "__main__":
    key = jax.random.PRNGKey(0)
    k1, k2, k3 = jax.random.split(key, 3)

    # 1) Small SchNet-sized activation (num_nodes=8, hidden=128), forced
    #    through the Pallas kernel (single (8, 128) block).
    x_small = jax.random.normal(k1, (8, 128), dtype=jnp.float32) * 5.0
    y_small = shifted_softplus(x_small, min_pallas_elems=0)
    jax.block_until_ready(y_small)
    assert y_small.shape == x_small.shape and y_small.dtype == x_small.dtype
    assert jnp.max(jnp.abs(y_small - _shifted_softplus_ref(x_small))) < 1e-5

    # 2) Larger slab: two (512, 1024) lane-dense blocks on a 'parallel' grid,
    #    no relayout (native last dim kept), no padding.
    x_big = jax.random.normal(k2, (1024, 1024), dtype=jnp.float32) * 5.0
    y_big = shifted_softplus(x_big)
    jax.block_until_ready(y_big)
    assert y_big.shape == x_big.shape and y_big.dtype == x_big.dtype
    assert jnp.max(jnp.abs(y_big - _shifted_softplus_ref(x_big))) < 1e-5

    # 3) Ragged shape forced through the kernel: exercises the zero-copy
    #    partial-last-block path (no pad / slice round-trip).
    x_rag = jax.random.normal(k3, (300, 200), dtype=jnp.float32) * 5.0
    y_rag = shifted_softplus(x_rag, min_pallas_elems=0)
    jax.block_until_ready(y_rag)
    assert y_rag.shape == x_rag.shape and y_rag.dtype == x_rag.dtype
    assert jnp.max(jnp.abs(y_rag - _shifted_softplus_ref(x_rag))) < 1e-5

    print("KERNEL_OK")
</pallas_src>

<mosaic_0001>
module attributes {stable_mosaic.version = 11 : i64} {
  func.func @_shifted_softplus_kernel(%arg0: i32, %arg1: memref<8x128xf32, #tpu.memory_space<vmem>>, %arg2: memref<8x128xf32, #tpu.memory_space<vmem>>) attributes {dimension_semantics = [#tpu.dimension_semantics<parallel>], iteration_bounds = array<i64: 1>, scalar_prefetch = 0 : i64, scratch_operands = 0 : i64, tpu.core_type = #tpu.core_type<tc>, window_params = [{transform_indices = @transform_0, window_bounds = array<i64: 8, 128>}, {transform_indices = @transform_1, window_bounds = array<i64: 8, 128>}]} {
    %c0 = arith.constant 0 : index
    %c0_0 = arith.constant 0 : index
    %0 = vector.load %arg1[%c0, %c0_0] : memref<8x128xf32, #tpu.memory_space<vmem>>, vector<8x128xf32>
    %cst = arith.constant 2.000000e+01 : f32
    %1 = vector.broadcast %cst : f32 to vector<8x128xf32>
    %2 = arith.cmpf ogt, %0, %1 : vector<8x128xf32>
    %cst_1 = arith.constant 2.000000e+01 : f32
    %3 = vector.broadcast %cst_1 : f32 to vector<8x128xf32>
    %4 = arith.minimumf %0, %3 : vector<8x128xf32>
    %5 = math.exp %4 : vector<8x128xf32>
    %6 = math.log1p %5 : vector<8x128xf32>
    %7 = arith.select %2, %0, %6 : vector<8x128xi1>, vector<8x128xf32>
    %cst_2 = arith.constant 0.693147182 : f32
    %8 = vector.broadcast %cst_2 : f32 to vector<8x128xf32>
    %9 = arith.subf %7, %8 : vector<8x128xf32>
    %c0_3 = arith.constant 0 : index
    %c0_4 = arith.constant 0 : index
    %10 = vector.load %arg2[%c0_3, %c0_4] : memref<8x128xf32, #tpu.memory_space<vmem>>, vector<8x128xf32>
    tpu.vector_store %arg2[%c0_3, %c0_4], %9 {strides = array<i32>} : memref<8x128xf32, #tpu.memory_space<vmem>>, vector<8x128xf32>,
    return
  }
  func.func @transform_0(%arg0: i32) -> (i32, i32) {
    %c0_i32 = arith.constant 0 : i32
    %c0_i32_0 = arith.constant 0 : i32
    return %arg0, %c0_i32 : i32, i32
  }
  func.func @transform_1(%arg0: i32) -> (i32, i32) {
    %c0_i32 = arith.constant 0 : i32
    %c0_i32_0 = arith.constant 0 : i32
    return %arg0, %c0_i32 : i32, i32
  }
}

</mosaic_0001>

<llo_original>
// kernel: tpu_custom_call.1
$region0: #{tpu_custom_call.1}
  #allocation0 [shape = 'u32[]', space=smem, size = 0x4, offset = 0x4, fixed_abs, tag = 'smem constant byte address 0x4 - core index']
  #allocation1 [shape = 'u32[144,128]{1,0:T(1,128)}', space=vmem, size = 0x12000, scoped, tag = 'internal scratch']
  %s0 = inlined_call_operand.hbm [shape: f32[8,128], index: 0, kind: input, shape index: {}]
  %s1 = inlined_call_operand.hbm [shape: f32[8,128], index: 1, kind: output, shape index: {}]
  %s2 = sld [smem:[#allocation0]]
  $region18: #{tpu_custom_call.1} parent=0
    _
  %s4 = ssub.s32 1, %s2
  %s5 = scalar_select 0, %s4, %s2
  $region1: #{tpu_custom_call.1} parent=0
    #allocation2 [shape = 'u8[4096]{0}', space=vmem, size = 0x1000, scoped, tag = 'input window, operand 0, single buffered']
    #allocation3 [shape = 's32[1]{0}', space=sflag, size = 0x4, scoped, tag = 'scoped memory for tpu_custom_call.1']
    #allocation4 [shape = 's32[1]{0}', space=sflag, size = 0x4, scoped, tag = 'scoped memory for tpu_custom_call.1']
    #allocation5 [shape = 'u8[4096]{0}', space=vmem, size = 0x1000, scoped, tag = 'output window, operand 0, single buffered']
    %6 = vsyncpa [#allocation3], 0
    %7 = vsyncpa [#allocation4], 0
    // Predicated region
    $region2: #{tpu_custom_call.1} parent=1 // pred_check
      _
    $region3: #{tpu_custom_call.1} parent=1 // pred_check_branch
      %9 = sbr.rel (0) target = $region5
    $region4: #{tpu_custom_call.1} parent=1 // pred_region
      %s11 = ssub.s32 128, 128
      %12 = vsyncadd [#allocation3], %s11
      %s14 = sshll.u32 [#allocation2], 4
      %s15 = int_to_ptr.vmem [resolvable:$true] %s14
      %17 = dma.hbm_to_vmem [thread:$0]  %s0, 128, %s15, [#allocation3]
    $region5: #{tpu_custom_call.1} parent=1 // pred_fallthru
      _
    // Predicated region
    $region6: #{tpu_custom_call.1} parent=1 // pred_check
      _
    $region7: #{tpu_custom_call.1} parent=1 // pred_check_branch
      %19 = sbr.rel (0) target = $region9
    $region8: #{tpu_custom_call.1} parent=1 // pred_region
      %20 = dma.done [#allocation3], 128
    $region9: #{tpu_custom_call.1} parent=1 // pred_fallthru
      _
    %v21 = vld [vmem:[#allocation2] sm:$0xff]
    %vm22 = vcmp.gt.f32.partialorder %v21, 20.0
    %v23 = vmin.f32 %v21, 20.0
    %v24 = vmul.f32 %v23, 1.442695
    %v25 = vpow.pop %v24
    %v26 = vadd.f32 %v25, 1.0
    %v27 = vlog2.pop %v26
    %v28 = vmul.f32 %v27, 0.6931472
    %v29 = vmul.f32 -0.5, %v25
    %v30 = vadd.f32 %v29, 1.0
    %v31 = vmul.f32 %v30, %v25
    %v32 = vand.u32 2147483647, %v25
    %vm33 = vcmp.lt.f32.partialorder %v32, 0.0004427343
    %v34 = vsel %vm33, %v31, %v28
    %v35 = vsel %vm22, %v21, %v34
    %v36 = vsub.f32 %v35, 0.6931472
    %37 = vst [vmem:[#allocation5] sm:$0xff] %v36
    // Predicated region
    $region10: #{tpu_custom_call.1} parent=1 // pred_check
      _
    $region11: #{tpu_custom_call.1} parent=1 // pred_check_branch
      %39 = sbr.rel (0) target = $region13
    $region12: #{tpu_custom_call.1} parent=1 // pred_region
      %s41 = ssub.s32 128, 128
      %42 = vsyncadd [#allocation4], %s41
      %s44 = sshll.u32 [#allocation5], 4
      %s45 = int_to_ptr.vmem [resolvable:$true] %s44
      %47 = dma.vmem_to_hbm [thread:$0]  %s45, 128, %s1, [#allocation4]
    $region13: #{tpu_custom_call.1} parent=1 // pred_fallthru
      _
    // Predicated region
    $region14: #{tpu_custom_call.1} parent=1 // pred_check
      _
    $region15: #{tpu_custom_call.1} parent=1 // pred_check_branch
      %49 = sbr.rel (0) target = $region17
    $region16: #{tpu_custom_call.1} parent=1 // pred_region
      %50 = dma.done [#allocation4], 128
    $region17: #{tpu_custom_call.1} parent=1 // pred_fallthru
      _
    %51 = vsyncpa [#allocation3], 1
    %52 = vsyncpa [#allocation4], 1

</llo_original>
